<compile_context>
chip_gen: v5e
topology: v5e:2x2
jax: 0.10.0
libtpu: 0.0.40
codegen_flags: <defaults>
</compile_context>

<pallas_src>
import math
import functools

import jax
import jax.numpy as jnp
from jax import lax
from jax.experimental import pallas as pl
from jax.experimental.pallas import tpu as pltpu


def _gru_chunk_kernel(x_ref, h0_ref, wih_ref, whh_ref, bih_ref, bhn_ref,
                      out_ref, gi_ref, *, mxu_dtype, tc, tb, hid, in_size):
    """One (batch-tile, time-chunk) grid point of the fused GRU recurrence.

    x_ref  : (tc, tb, IN)  mxu_dtype  -- inputs for the Tc timesteps of this chunk
    h0_ref : (tb, H)       float32    -- initial hidden state (read at chunk 0)
    wih_ref: (IN, 3H)      mxu_dtype  -- fused in2hid weights, columns [r | z | n]
    whh_ref: (H, 3H)       mxu_dtype  -- fused hid2hid weights, columns [r | z | n]
    bih_ref: (1, 3H)       float32    -- b_ih with b_hh folded into the r/z thirds
    bhn_ref: (1, H)        float32    -- b_hh of the n gate (kept apart: reset * (.))
    out_ref: (tb, H)       float32    -- resident carry of the hidden state
    gi_ref : (tc, tb, 3H)  float32    -- scratch: input projections for the chunk
    """
    c = pl.program_id(1)

    @pl.when(c == 0)
    def _init():
        out_ref[...] = h0_ref[...]

    # ---- Input path, hoisted off the serial critical path: ONE big
    # (Tc*tb, IN) x (IN, 3H) matmul for the whole chunk (large M, lane-dense N=3H).
    if tc == 1:
        x2d = x_ref[0]                                    # (tb, IN)
    else:
        # tb % 8 == 0 is guaranteed by the wrapper -> sublane-aligned merge (cheap).
        x2d = x_ref[...].reshape(tc * tb, in_size)
    gi = jnp.dot(x2d, wih_ref[...], preferred_element_type=jnp.float32) + bih_ref[...]
    if tc == 1:
        gi_ref[0] = gi
    else:
        gi_ref[...] = gi.reshape(tc, tb, 3 * hid)

    whh = whh_ref[...]                                    # hoisted loads
    bhn = bhn_ref[...]

    # ---- Serial recurrence: one (tb, H) x (H, 3H) matmul + elementwise per step.
    def step(t, carry):
        h = out_ref[...]                                  # (tb, H) float32 carry
        gh = jnp.dot(h.astype(mxu_dtype), whh,
                     preferred_element_type=jnp.float32)  # (tb, 3H)
        g = gi_ref[t]                                     # (tb, 3H) f32, biases folded
        in_r, in_z, in_n = g[:, :hid], g[:, hid:2 * hid], g[:, 2 * hid:]
        hid_r, hid_z = gh[:, :hid], gh[:, hid:2 * hid]
        hid_n = gh[:, 2 * hid:] + bhn
        reset = jax.nn.sigmoid(in_r + hid_r)
        update = jax.nn.sigmoid(in_z + hid_z)
        new = jnp.tanh(in_n + reset * hid_n)
        out_ref[...] = new + update * (h - new)
        return carry

    lax.fori_loop(0, tc, step, 0, unroll=True)


def pack_gru_params(w_ih, w_hh, b_ih, b_hh, *, mxu_dtype=jnp.bfloat16):
    """PyTorch nn.Linear layout -> fused, transposed, MXU-ready layout (done ONCE).

      w_ih (3H, IN) -> (IN, 3H)       gate columns [r | z | n]
      w_hh (3H, H)  -> (H, 3H)
      b_ih/b_hh     -> b_ih_folded (1, 3H) with b_hh folded into the r and z thirds,
                       plus b_hh_n (1, H) kept separate (reset multiplies it).
    Biases stay float32 (added after float32 MXU accumulation).
    """
    hid = w_hh.shape[1]
    wih_t = jnp.transpose(w_ih).astype(mxu_dtype)          # (IN, 3H)
    whh_t = jnp.transpose(w_hh).astype(mxu_dtype)          # (H, 3H)
    b_ih = b_ih.astype(jnp.float32)
    b_hh = b_hh.astype(jnp.float32)
    bih_folded = jnp.concatenate([
        b_ih[:hid] + b_hh[:hid],                 # r: b_ir + b_hr
        b_ih[hid:2 * hid] + b_hh[hid:2 * hid],   # z: b_iz + b_hz
        b_ih[2 * hid:],                          # n: b_in only
    ]).reshape(1, 3 * hid)
    bhh_n = b_hh[2 * hid:].reshape(1, hid)
    return wih_t, whh_t, bih_folded, bhh_n


def _pick_batch_block(batch):
    """Batch tile: a multiple of 8 when splitting, preferring >= 2 tiles so the
    'parallel' batch axis shards across both TensorCores on v7x; tiles up to 256
    to fill the 256-row MXU on v6e/v7x."""
    if batch < 16 or batch % 8 != 0:
        return batch
    for tb in (256, 128, 64, 32, 16, 8):
        if batch % tb == 0 and batch // tb >= 2:
            return tb
    return batch


def _pick_time_chunk(seq_len, tb, hid, max_unroll=16, scratch_budget=2 << 20):
    """Largest divisor of T bounded by the unroll cap and a gi-scratch VMEM budget."""
    per_step = max(1, tb * 3 * hid * 4)
    cap = max(1, min(max_unroll, scratch_budget // per_step, seq_len))
    tc = 1
    for cand in range(2, cap + 1):
        if seq_len % cand == 0:
            tc = cand
    return tc


def gru_sequence_forward(x_seq, h0, packed_params, *, mxu_dtype=jnp.bfloat16,
                         time_chunk=None):
    """Run the GRU cell over a whole sequence in a single pallas_call.

    x_seq: (T, B, IN); h0: (B, H) float32.  Returns the final hidden state (B, H).
    """
    wih, whh, bih, bhn = packed_params
    mxu_dtype = jnp.dtype(mxu_dtype)
    T, B, IN = x_seq.shape
    H = h0.shape[1]

    tb = _pick_batch_block(B)
    n_btiles = B // tb
    if time_chunk is not None:
        tc = int(time_chunk)
    elif tb % 8 == 0:
        tc = _pick_time_chunk(T, tb, H)
    else:
        tc = 1     # unaligned batch tile: keep the in-kernel chunk reshape trivial
    assert B % tb == 0 and T % tc == 0
    n_chunks = T // tc

    x_seq = x_seq.astype(mxu_dtype)     # single cast for the whole sequence
    h0 = h0.astype(jnp.float32)

    # Scoped-VMEM budget: resident (double-buffered) weights + blocks + gi scratch,
    # capped at 85% of physical per-core VMEM (64 MiB on v7x, 128 MiB on v5e/v6e).
    itm = mxu_dtype.itemsize
    w_bytes = (IN + H) * 3 * H * itm + 4 * H * 4
    blk_bytes = tc * tb * IN * itm + 2 * tb * H * 4 + tc * tb * 3 * H * 4
    vmem_need = 2 * (w_bytes + blk_bytes) + (4 << 20)
    try:
        hw_cap = int(0.85 * pltpu.get_tpu_info().vmem_capacity_bytes)
    except Exception:
        hw_cap = 48 << 20
    vmem_limit = int(min(max(vmem_need, 16 << 20), hw_cap))

    kernel = functools.partial(_gru_chunk_kernel, mxu_dtype=mxu_dtype,
                               tc=tc, tb=tb, hid=H, in_size=IN)

    # NOTE: if H is not a multiple of 128 in real workloads, padding H (and the
    # packed weights) to 128 lanes makes the gate slices / stores lane-dense.
    out = pl.pallas_call(
        kernel,
        out_shape=jax.ShapeDtypeStruct((B, H), jnp.float32),
        grid_spec=pltpu.PrefetchScalarGridSpec(
            num_scalar_prefetch=0,
            grid=(n_btiles, n_chunks),
            in_specs=[
                pl.BlockSpec((tc, tb, IN), lambda b, c: (c, b, 0)),   # x chunk (streamed)
                pl.BlockSpec((tb, H), lambda b, c: (b, 0)),           # h0 (once per b tile)
                pl.BlockSpec((IN, 3 * H), lambda b, c: (0, 0)),       # W_ih (VMEM resident)
                pl.BlockSpec((H, 3 * H), lambda b, c: (0, 0)),        # W_hh (VMEM resident)
                pl.BlockSpec((1, 3 * H), lambda b, c: (0, 0)),        # folded b_ih (+b_hh r,z)
                pl.BlockSpec((1, H), lambda b, c: (0, 0)),            # b_hh[n]
            ],
            out_specs=pl.BlockSpec((tb, H), lambda b, c: (b, 0)),
            scratch_shapes=[pltpu.VMEM((tc, tb, 3 * H), jnp.float32)],
        ),
        input_output_aliases={1: 0},   # reuse the h0 buffer for the output
        compiler_params=pltpu.CompilerParams(
            dimension_semantics=("parallel", "arbitrary"),
            vmem_limit_bytes=vmem_limit,
        ),
    )(x_seq, h0, wih, whh, bih, bhn)
    return out


def gru_cell_forward(x, h, packed_params, *, mxu_dtype=jnp.float32):
    """Single GRUCell step (the PyTorch module's forward): T=1 fused kernel."""
    return gru_sequence_forward(x[None], h, packed_params, mxu_dtype=mxu_dtype)


# ----------------------------- pure-JAX references -----------------------------

def _gru_step_reference(x, h, w_ih, w_hh, b_ih, b_hh, h_mxu=None):
    h_mxu = h if h_mxu is None else h_mxu
    gi = x @ w_ih.T + b_ih
    gh = h_mxu @ w_hh.T + b_hh
    H = h.shape[1]
    in_r, in_z, in_n = gi[:, :H], gi[:, H:2 * H], gi[:, 2 * H:]
    hid_r, hid_z, hid_n = gh[:, :H], gh[:, H:2 * H], gh[:, 2 * H:]
    reset = jax.nn.sigmoid(in_r + hid_r)
    update = jax.nn.sigmoid(in_z + hid_z)
    new = jnp.tanh(in_n + reset * hid_n)
    return new + update * (h - new)


def gru_cell_reference(x, h, w_ih, w_hh, b_ih, b_hh):
    """Mirrors the PyTorch forward (full float32)."""
    return _gru_step_reference(x, h, w_ih, w_hh, b_ih, b_hh)


def gru_sequence_reference(x_seq, h0, w_ih, w_hh, b_ih, b_hh, *, mxu_dtype=None):
    """Sequence reference. If mxu_dtype is set, mirrors the kernel's bf16 MXU
    operand casts (weights / x / per-step h) while keeping f32 math."""
    def q(a):
        return a if mxu_dtype is None else a.astype(mxu_dtype).astype(jnp.float32)

    w_ih_c, w_hh_c = q(w_ih), q(w_hh)
    h = h0
    for t in range(x_seq.shape[0]):
        h = _gru_step_reference(q(x_seq[t]), h, w_ih_c, w_hh_c, b_ih, b_hh, h_mxu=q(h))
    return h


if __name__ == "__main__":
    IN_SIZE = 16
    HID_SIZE = 32
    BATCH = 8
    SEQ_LEN = 8

    key = jax.random.PRNGKey(0)
    k_x, k_h, k_wih, k_whh, k_bih, k_bhh = jax.random.split(key, 6)

    # Deterministic init: uniform(-std, std), std = 1/sqrt(hid_size) (adjust_params()).
    std = 1.0 / math.sqrt(HID_SIZE)
    w_ih = jax.random.uniform(k_wih, (3 * HID_SIZE, IN_SIZE), jnp.float32, -std, std)
    w_hh = jax.random.uniform(k_whh, (3 * HID_SIZE, HID_SIZE), jnp.float32, -std, std)
    b_ih = jax.random.uniform(k_bih, (3 * HID_SIZE,), jnp.float32, -std, std)
    b_hh = jax.random.uniform(k_bhh, (3 * HID_SIZE,), jnp.float32, -std, std)

    x_seq = jax.random.normal(k_x, (SEQ_LEN, BATCH, IN_SIZE), jnp.float32)
    h0 = jax.random.normal(k_h, (BATCH, HID_SIZE), jnp.float32)

    # Pack parameters ONCE (transpose + gate fusion + bias folding, out of the hot path).
    params_f32 = pack_gru_params(w_ih, w_hh, b_ih, b_hh, mxu_dtype=jnp.float32)
    params_bf16 = pack_gru_params(w_ih, w_hh, b_ih, b_hh, mxu_dtype=jnp.bfloat16)

    # 1) Single GRUCell step (the PyTorch module's forward), f32 MXU operands.
    out_step = jax.block_until_ready(
        gru_cell_forward(x_seq[0], h0, params_f32, mxu_dtype=jnp.float32))
    ref_step = gru_cell_reference(x_seq[0], h0, w_ih, w_hh, b_ih, b_hh)
    assert out_step.shape == (BATCH, HID_SIZE)
    assert jnp.allclose(out_step, ref_step, atol=1e-4, rtol=1e-4), "single-step f32 mismatch"

    # 2) Fused sequence (one pallas_call, time-chunked), f32 MXU operands.
    out_seq = jax.block_until_ready(
        gru_sequence_forward(x_seq, h0, params_f32, mxu_dtype=jnp.float32))
    ref_seq = gru_sequence_reference(x_seq, h0, w_ih, w_hh, b_ih, b_hh)
    assert out_seq.shape == (BATCH, HID_SIZE)
    assert jnp.allclose(out_seq, ref_seq, atol=2e-4, rtol=2e-4), "sequence f32 mismatch"

    # 3) Fused sequence with bf16 MXU operands (recommended default on v5e/v6e/v7x);
    #    elementwise / EUP math stays float32.
    out_seq_bf16 = jax.block_until_ready(
        gru_sequence_forward(x_seq, h0, params_bf16, mxu_dtype=jnp.bfloat16))
    ref_seq_bf16 = gru_sequence_reference(x_seq, h0, w_ih, w_hh, b_ih, b_hh,
                                          mxu_dtype=jnp.bfloat16)
    assert jnp.allclose(out_seq_bf16, ref_seq_bf16, atol=3e-3, rtol=3e-3), "sequence bf16 mismatch"

    print("KERNEL_OK")
</pallas_src>

<mosaic_0001>
module attributes {stable_mosaic.version = 11 : i64} {
  func.func @_gru_chunk_kernel(%arg0: i32, %arg1: i32, %arg2: memref<1x8x16xf32, #tpu.memory_space<vmem>>, %arg3: memref<8x32xf32, #tpu.memory_space<vmem>>, %arg4: memref<16x96xf32, #tpu.memory_space<vmem>>, %arg5: memref<32x96xf32, #tpu.memory_space<vmem>>, %arg6: memref<1x96xf32, #tpu.memory_space<vmem>>, %arg7: memref<1x32xf32, #tpu.memory_space<vmem>>, %arg8: memref<8x32xf32, #tpu.memory_space<vmem>>, %arg9: memref<1x8x96xf32, #tpu.memory_space<vmem>>) attributes {dimension_semantics = [#tpu.dimension_semantics<parallel>, #tpu.dimension_semantics<arbitrary>], iteration_bounds = array<i64: 1, 1>, scalar_prefetch = 0 : i64, scratch_operands = 1 : i64, tpu.core_type = #tpu.core_type<tc>, window_params = [{transform_indices = @transform_0, window_bounds = array<i64: 1, 8, 16>}, {transform_indices = @transform_1, window_bounds = array<i64: 8, 32>}, {pipeline_mode = #tpu.pipeline_mode<synchronous>, transform_indices = @transform_2, window_bounds = array<i64: 16, 96>}, {pipeline_mode = #tpu.pipeline_mode<synchronous>, transform_indices = @transform_3, window_bounds = array<i64: 32, 96>}, {pipeline_mode = #tpu.pipeline_mode<synchronous>, transform_indices = @transform_4, window_bounds = array<i64: 1, 96>}, {pipeline_mode = #tpu.pipeline_mode<synchronous>, transform_indices = @transform_5, window_bounds = array<i64: 1, 32>}, {transform_indices = @transform_6, window_bounds = array<i64: 8, 32>}]} {
    %c0_i32 = arith.constant 0 : i32
    %0 = arith.cmpi eq, %arg1, %c0_i32 : i32
    %1 = arith.extui %0 : i1 to i32
    %c0_i32_0 = arith.constant 0 : i32
    %2 = arith.cmpi ne, %1, %c0_i32_0 : i32
    scf.if %2 {
      %c0_24 = arith.constant 0 : index
      %c0_25 = arith.constant 0 : index
      %47 = vector.load %arg3[%c0_24, %c0_25] : memref<8x32xf32, #tpu.memory_space<vmem>>, vector<8x32xf32>
      %c0_26 = arith.constant 0 : index
      %c0_27 = arith.constant 0 : index
      %48 = vector.load %arg8[%c0_26, %c0_27] : memref<8x32xf32, #tpu.memory_space<vmem>>, vector<8x32xf32>
      tpu.vector_store %arg8[%c0_26, %c0_27], %47 {strides = array<i32>} : memref<8x32xf32, #tpu.memory_space<vmem>>, vector<8x32xf32>,
    } else {
    }
    %c0 = arith.constant 0 : index
    %c0_1 = arith.constant 0 : index
    %c0_2 = arith.constant 0 : index
    %3 = vector.load %arg2[%c0, %c0_1, %c0_2] : memref<1x8x16xf32, #tpu.memory_space<vmem>>, vector<1x8x16xf32>
    %4 = vector.shape_cast %3 : vector<1x8x16xf32> to vector<8x16xf32>
    %c0_3 = arith.constant 0 : index
    %c0_4 = arith.constant 0 : index
    %5 = vector.load %arg4[%c0_3, %c0_4] : memref<16x96xf32, #tpu.memory_space<vmem>>, vector<16x96xf32>
    %cst = arith.constant dense<0.000000e+00> : vector<8x96xf32>
    %6 = tpu.matmul %4, %5, %cst {dimension_numbers = #tpu.dot_dimension_numbers<[1], [0], [0], [1], [0, 0, 1, 1], [], []>} : vector<8x16xf32>, vector<16x96xf32>, vector<8x96xf32> -> vector<8x96xf32>
    %c0_5 = arith.constant 0 : index
    %c0_6 = arith.constant 0 : index
    %7 = vector.load %arg6[%c0_5, %c0_6] : memref<1x96xf32, #tpu.memory_space<vmem>>, vector<1x96xf32>
    %8 = vector.broadcast %7 : vector<1x96xf32> to vector<8x96xf32>
    %9 = arith.addf %6, %8 : vector<8x96xf32>
    %c0_7 = arith.constant 0 : index
    %c0_8 = arith.constant 0 : index
    %c0_9 = arith.constant 0 : index
    %10 = vector.load %arg9[%c0_7, %c0_8, %c0_9] : memref<1x8x96xf32, #tpu.memory_space<vmem>>, vector<1x8x96xf32>
    %11 = vector.shape_cast %10 : vector<1x8x96xf32> to vector<8x96xf32>
    %12 = vector.shape_cast %9 : vector<8x96xf32> to vector<1x8x96xf32>
    tpu.vector_store %arg9[%c0_7, %c0_8, %c0_9], %12 {strides = array<i32>} : memref<1x8x96xf32, #tpu.memory_space<vmem>>, vector<1x8x96xf32>,
    %c0_10 = arith.constant 0 : index
    %c0_11 = arith.constant 0 : index
    %13 = vector.load %arg5[%c0_10, %c0_11] : memref<32x96xf32, #tpu.memory_space<vmem>>, vector<32x96xf32>
    %c0_12 = arith.constant 0 : index
    %c0_13 = arith.constant 0 : index
    %14 = vector.load %arg7[%c0_12, %c0_13] : memref<1x32xf32, #tpu.memory_space<vmem>>, vector<1x32xf32>
    %c0_i32_14 = arith.constant 0 : i32
    %c0_15 = arith.constant 0 : index
    %c0_16 = arith.constant 0 : index
    %15 = vector.load %arg8[%c0_15, %c0_16] : memref<8x32xf32, #tpu.memory_space<vmem>>, vector<8x32xf32>
    %cst_17 = arith.constant dense<0.000000e+00> : vector<8x96xf32>
    %16 = tpu.matmul %15, %13, %cst_17 {dimension_numbers = #tpu.dot_dimension_numbers<[1], [0], [0], [1], [0, 0, 1, 1], [], []>} : vector<8x32xf32>, vector<32x96xf32>, vector<8x96xf32> -> vector<8x96xf32>
    %17 = arith.index_cast %c0_i32_14 : i32 to index
    %c0_18 = arith.constant 0 : index
    %c0_19 = arith.constant 0 : index
    %18 = vector.load %arg9[%17, %c0_18, %c0_19] : memref<1x8x96xf32, #tpu.memory_space<vmem>>, vector<1x8x96xf32>
    %19 = vector.shape_cast %18 : vector<1x8x96xf32> to vector<8x96xf32>
    %20 = vector.extract_strided_slice %19 {offsets = [0, 0], sizes = [8, 32], strides = [1, 1]} : vector<8x96xf32> to vector<8x32xf32>
    %21 = vector.extract_strided_slice %19 {offsets = [0, 32], sizes = [8, 32], strides = [1, 1]} : vector<8x96xf32> to vector<8x32xf32>
    %22 = vector.extract_strided_slice %19 {offsets = [0, 64], sizes = [8, 32], strides = [1, 1]} : vector<8x96xf32> to vector<8x32xf32>
    %23 = vector.extract_strided_slice %16 {offsets = [0, 0], sizes = [8, 32], strides = [1, 1]} : vector<8x96xf32> to vector<8x32xf32>
    %24 = vector.extract_strided_slice %16 {offsets = [0, 32], sizes = [8, 32], strides = [1, 1]} : vector<8x96xf32> to vector<8x32xf32>
    %25 = vector.extract_strided_slice %16 {offsets = [0, 64], sizes = [8, 32], strides = [1, 1]} : vector<8x96xf32> to vector<8x32xf32>
    %26 = vector.broadcast %14 : vector<1x32xf32> to vector<8x32xf32>
    %27 = arith.addf %25, %26 : vector<8x32xf32>
    %28 = arith.addf %20, %23 : vector<8x32xf32>
    %29 = arith.negf %28 : vector<8x32xf32>
    %30 = math.exp %29 : vector<8x32xf32>
    %cst_20 = arith.constant 1.000000e+00 : f32
    %31 = vector.broadcast %cst_20 : f32 to vector<8x32xf32>
    %32 = arith.addf %31, %30 : vector<8x32xf32>
    %33 = arith.divf %31, %32 : vector<8x32xf32>
    %34 = arith.addf %21, %24 : vector<8x32xf32>
    %35 = arith.negf %34 : vector<8x32xf32>
    %36 = math.exp %35 : vector<8x32xf32>
    %cst_21 = arith.constant 1.000000e+00 : f32
    %37 = vector.broadcast %cst_21 : f32 to vector<8x32xf32>
    %38 = arith.addf %37, %36 : vector<8x32xf32>
    %39 = arith.divf %37, %38 : vector<8x32xf32>
    %40 = arith.mulf %33, %27 : vector<8x32xf32>
    %41 = arith.addf %22, %40 : vector<8x32xf32>
    %42 = math.tanh %41 : vector<8x32xf32>
    %43 = arith.subf %15, %42 : vector<8x32xf32>
    %44 = arith.mulf %39, %43 : vector<8x32xf32>
    %45 = arith.addf %42, %44 : vector<8x32xf32>
    %c0_22 = arith.constant 0 : index
    %c0_23 = arith.constant 0 : index
    %46 = vector.load %arg8[%c0_22, %c0_23] : memref<8x32xf32, #tpu.memory_space<vmem>>, vector<8x32xf32>
    tpu.vector_store %arg8[%c0_22, %c0_23], %45 {strides = array<i32>} : memref<8x32xf32, #tpu.memory_space<vmem>>, vector<8x32xf32>,
    %c1_i32 = arith.constant 1 : i32
    return
  }
  func.func @transform_0(%arg0: i32, %arg1: i32) -> (i32, i32, i32) {
    %c0_i32 = arith.constant 0 : i32
    %c0_i32_0 = arith.constant 0 : i32
    return %arg1, %arg0, %c0_i32 : i32, i32, i32
  }
  func.func @transform_1(%arg0: i32, %arg1: i32) -> (i32, i32) {
    %c0_i32 = arith.constant 0 : i32
    %c0_i32_0 = arith.constant 0 : i32
    return %arg0, %c0_i32 : i32, i32
  }
  func.func @transform_2(%arg0: i32, %arg1: i32) -> (i32, i32) {
    %c0_i32 = arith.constant 0 : i32
    %c0_i32_0 = arith.constant 0 : i32
    %c0_i32_1 = arith.constant 0 : i32
    return %c0_i32, %c0_i32_0 : i32, i32
  }
  func.func @transform_3(%arg0: i32, %arg1: i32) -> (i32, i32) {
    %c0_i32 = arith.constant 0 : i32
    %c0_i32_0 = arith.constant 0 : i32
    %c0_i32_1 = arith.constant 0 : i32
    return %c0_i32, %c0_i32_0 : i32, i32
  }
  func.func @transform_4(%arg0: i32, %arg1: i32) -> (i32, i32) {
    %c0_i32 = arith.constant 0 : i32
    %c0_i32_0 = arith.constant 0 : i32
    %c0_i32_1 = arith.constant 0 : i32
    return %c0_i32, %c0_i32_0 : i32, i32
  }
  func.func @transform_5(%arg0: i32, %arg1: i32) -> (i32, i32) {
    %c0_i32 = arith.constant 0 : i32
    %c0_i32_0 = arith.constant 0 : i32
    %c0_i32_1 = arith.constant 0 : i32
    return %c0_i32, %c0_i32_0 : i32, i32
  }
  func.func @transform_6(%arg0: i32, %arg1: i32) -> (i32, i32) {
    %c0_i32 = arith.constant 0 : i32
    %c0_i32_0 = arith.constant 0 : i32
    return %arg0, %c0_i32 : i32, i32
  }
}

</mosaic_0001>

<llo_original>
// kernel: tpu_custom_call.1
$region0: #{tpu_custom_call.1}
  #allocation0 [shape = 'u32[]', space=smem, size = 0x4, offset = 0x4, fixed_abs, tag = 'smem constant byte address 0x4 - core index']
  #allocation1 [shape = 'u32[72,128]{1,0:T(1,128)}', space=vmem, size = 0x9000, scoped, tag = 'internal scratch']
  #allocation2 [shape = 'f32[1,8,96]{2,1,0:T(8,128)}', space=vmem, size = 0x1000, scoped, tag = 'scratch operand']
  %s0 = inlined_call_operand.hbm [shape: f32[1,8,16], index: 0, kind: input, shape index: {}]
  %s1 = inlined_call_operand.hbm [shape: f32[8,32], index: 1, kind: input, shape index: {}, may-alias: {1,6}]
  %s2 = inlined_call_operand.vmem [shape: f32[16,96], index: 2, kind: input, shape index: {}]
  %s3 = inlined_call_operand.hbm [shape: f32[32,96], index: 3, kind: input, shape index: {}]
  %s4 = inlined_call_operand.vmem [shape: f32[1,96], index: 4, kind: input, shape index: {}]
  %s5 = inlined_call_operand.vmem [shape: f32[1,32], index: 5, kind: input, shape index: {}]
  %s6 = inlined_call_operand.hbm [shape: f32[8,32], index: 6, kind: output, shape index: {}, may-alias: {1,6}]
  %s7 = sld [smem:[#allocation0]]
  $region50: #{tpu_custom_call.1} parent=0
    _
  %s9 = ssub.s32 1, %s7
  %s10 = scalar_select 0, %s9, %s7
  $region1: #{tpu_custom_call.1} parent=0
    #allocation3 [shape = 'u8[4096]{0}', space=vmem, size = 0x1000, scoped, tag = 'input window, operand 0, single buffered']
    #allocation4 [shape = 's32[1]{0}', space=sflag, size = 0x4, scoped, tag = 'scoped memory for tpu_custom_call.1']
    #allocation5 [shape = 's32[1]{0}', space=sflag, size = 0x4, scoped, tag = 'scoped memory for tpu_custom_call.1']
    #allocation6 [shape = 'u8[4096]{0}', space=vmem, size = 0x1000, scoped, tag = 'input window, operand 1, single buffered']
    #allocation7 [shape = 's32[1]{0}', space=sflag, size = 0x4, scoped, tag = 'scoped memory for tpu_custom_call.1']
    #allocation8 [shape = 'u8[16384]{0}', space=vmem, size = 0x4000, scoped, tag = 'input window, operand 3, single buffered']
    #allocation9 [shape = 'u8[4096]{0}', space=vmem, size = 0x1000, scoped, tag = 'output window, operand 0, single buffered']
    %11 = vsyncpa [#allocation4], 0
    %12 = vsyncpa [#allocation7], 0
    %13 = vsyncpa [#allocation5], 0
    // Predicated region
    $region2: #{tpu_custom_call.1} parent=1 // pred_check
      _
    $region3: #{tpu_custom_call.1} parent=1 // pred_check_branch
      %15 = sbr.rel (0) target = $region5
    $region4: #{tpu_custom_call.1} parent=1 // pred_region
      %17 = vsyncadd [#allocation4], 0
      %s19 = sshll.u32 %s0, 4
      %s20 = int_to_ptr.hbm [resolvable:$true] %s19
      %s21 = sshll.u32 [#allocation3], 4
      %s22 = int_to_ptr.vmem [resolvable:$true] %s21
      %24 = dma.hbm_to_vmem [thread:$0]  %s20, 128, %s22, [#allocation4]
    $region5: #{tpu_custom_call.1} parent=1 // pred_fallthru
      _
    // Predicated region
    $region6: #{tpu_custom_call.1} parent=1 // pred_check
      _
    $region7: #{tpu_custom_call.1} parent=1 // pred_check_branch
      %26 = sbr.rel (0) target = $region9
    $region8: #{tpu_custom_call.1} parent=1 // pred_region
      %28 = vsyncadd [#allocation7], 0
      %s30 = sshll.u32 %s1, 4
      %s31 = int_to_ptr.hbm [resolvable:$true] %s30
      %s32 = sshll.u32 [#allocation6], 4
      %s33 = int_to_ptr.vmem [resolvable:$true] %s32
      %35 = dma.hbm_to_vmem [thread:$0]  %s31, 128, %s33, [#allocation7]
    $region9: #{tpu_custom_call.1} parent=1 // pred_fallthru
      _
    // Predicated region
    $region10: #{tpu_custom_call.1} parent=1 // pred_check
      _
    $region11: #{tpu_custom_call.1} parent=1 // pred_check_branch
      %37 = sbr.rel (0) target = $region13
    $region12: #{tpu_custom_call.1} parent=1 // pred_region
      _
    $region13: #{tpu_custom_call.1} parent=1 // pred_fallthru
      _
    // Predicated region
    $region14: #{tpu_custom_call.1} parent=1 // pred_check
      _
    $region15: #{tpu_custom_call.1} parent=1 // pred_check_branch
      %39 = sbr.rel (0) target = $region17
    $region16: #{tpu_custom_call.1} parent=1 // pred_region
      %41 = vsyncadd [#allocation7], 0
      %s42 = sshll.u32 %s3, 4
      %s43 = int_to_ptr.hbm [resolvable:$true] %s42
      %s44 = sshll.u32 [#allocation8], 4
      %s45 = int_to_ptr.vmem [resolvable:$true] %s44
      %50 = dma.hbm_to_vmem [thread:$0]  %s43, 512, %s45, [#allocation7], 128, 128, 8
    $region17: #{tpu_custom_call.1} parent=1 // pred_fallthru
      _
    // Predicated region
    $region18: #{tpu_custom_call.1} parent=1 // pred_check
      _
    $region19: #{tpu_custom_call.1} parent=1 // pred_check_branch
      %52 = sbr.rel (0) target = $region21
    $region20: #{tpu_custom_call.1} parent=1 // pred_region
      _
    $region21: #{tpu_custom_call.1} parent=1 // pred_fallthru
      _
    // Predicated region
    $region22: #{tpu_custom_call.1} parent=1 // pred_check
      _
    $region23: #{tpu_custom_call.1} parent=1 // pred_check_branch
      %54 = sbr.rel (0) target = $region25
    $region24: #{tpu_custom_call.1} parent=1 // pred_region
      _
    $region25: #{tpu_custom_call.1} parent=1 // pred_fallthru
      _
    // Predicated region
    $region26: #{tpu_custom_call.1} parent=1 // pred_check
      _
    $region27: #{tpu_custom_call.1} parent=1 // pred_check_branch
      %56 = sbr.rel (0) target = $region29
    $region28: #{tpu_custom_call.1} parent=1 // pred_region
      %58 = dma.done [#allocation4], 128
    $region29: #{tpu_custom_call.1} parent=1 // pred_fallthru
      _
    // Predicated region
    $region30: #{tpu_custom_call.1} parent=1 // pred_check
      _
    $region31: #{tpu_custom_call.1} parent=1 // pred_check_branch
      %60 = sbr.rel (0) target = $region33
    $region32: #{tpu_custom_call.1} parent=1 // pred_region
      %62 = dma.done [#allocation7], 128
    $region33: #{tpu_custom_call.1} parent=1 // pred_fallthru
      _
    // Predicated region
    $region34: #{tpu_custom_call.1} parent=1 // pred_check
      _
    $region35: #{tpu_custom_call.1} parent=1 // pred_check_branch
      %64 = sbr.rel (0) target = $region37
    $region36: #{tpu_custom_call.1} parent=1 // pred_region
      %66 = dma.done [#allocation7], 512
    $region37: #{tpu_custom_call.1} parent=1 // pred_fallthru
      _
    %p67 = scmp.eq.s32.totalorder 0, 0
    // Predicated region
    $region38: #{tpu_custom_call.1} parent=1 // pred_check
      %p68 = pneg %p67
    $region39: #{tpu_custom_call.1} parent=1 // pred_check_branch
      %70 = sbr.rel (%p68) target = $region41
    $region40: #{tpu_custom_call.1} parent=1 // pred_region
      %v71 = vld [vmem:[#allocation6] sm:$0xff]
      %vm72 = vcmask 261120
      %73 = vst.msk [vmem:[#allocation9] sm:$0xff] %vm72, %v71
    $region41: #{tpu_custom_call.1} parent=1 // pred_fallthru
      _
    %v74 = vld [vmem:[#allocation3] sm:$0xff]
    %v75 = vld [vmem:[%s2] sm:$0xff]
    %v76 = vld [vmem:[%s2 + $0x8] sm:$0xff]
    %v77 = vld [vmem:[%s4] sm:$0x1]
    %v79 = vperm.slane %v77, 0
    %vm81 = vcmask 130048
    %v83 = vsel %vm81, %v74, 0
    %85 = vmatpush.msra.mxu0 0.0
    %86 = vmatpush.msra.mxu0 0.0
    %87 = vmatpush.msra.mxu0 0.0
    %88 = vmatpush.msra.mxu0 0.0
    %89 = vmatpush.msra.mxu0 0.0
    %90 = vmatpush.msra.mxu0 0.0
    %91 = vmatpush.msra.mxu0 0.0
    %92 = vmatpush.msra.mxu0 0.0
    %93 = vmatpush.msra.mxu0 0.0
    %94 = vmatpush.msra.mxu0 0.0
    %95 = vmatpush.msra.mxu0 0.0
    %96 = vmatpush.msra.mxu0 0.0
    %97 = vmatpush.msra.mxu0 0.0
    %98 = vmatpush.msra.mxu0 0.0
    %99 = vmatpush.msra.mxu0 %v76
    %100 = vmatpush.msra.mxu0 %v75
    %101 = vmatmul.f32.gmra.mxu0 %v83
    %v102 = vpop.f32.mrf.mxu0
    %v103 = vadd.f32 %v79, %v102
    %104 = vdwg.mxu0
    %vm105 = vcmask 785408
    %106 = vst.msk [vmem:[#allocation2] sm:$0xff] %vm105, %v103
    %v107 = vld [vmem:[#allocation8] sm:$0xff]
    %v108 = vld [vmem:[#allocation8 + $0x8] sm:$0xff]
    %v109 = vld [vmem:[#allocation8 + $0x10] sm:$0xff]
    %v110 = vld [vmem:[#allocation8 + $0x18] sm:$0xff]
    %v111 = vld [vmem:[%s5] sm:$0x1]
    %v112 = vld [vmem:[#allocation9] sm:$0xff]
    %vm113 = vcmask 261120
    %v115 = vsel %vm113, %v112, 0
    %117 = vmatpush.msra.mxu0 0.0
    %118 = vmatpush.msra.mxu0 0.0
    %119 = vmatpush.msra.mxu0 0.0
    %120 = vmatpush.msra.mxu0 0.0
    %121 = vmatpush.msra.mxu0 0.0
    %122 = vmatpush.msra.mxu0 0.0
    %123 = vmatpush.msra.mxu0 0.0
    %124 = vmatpush.msra.mxu0 0.0
    %125 = vmatpush.msra.mxu0 0.0
    %126 = vmatpush.msra.mxu0 0.0
    %127 = vmatpush.msra.mxu0 0.0
    %128 = vmatpush.msra.mxu0 0.0
    %129 = vmatpush.msra.mxu0 %v110
    %130 = vmatpush.msra.mxu0 %v109
    %131 = vmatpush.msra.mxu0 %v108
    %132 = vmatpush.msra.mxu0 %v107
    %133 = vmatmul.f32.gmra.mxu0 %v115
    %v134 = vpop.f32.mrf.mxu0
    %v135 = vadd.f32 0.0, %v134
    %136 = vdwg.mxu0
    %v137 = vld [vmem:[#allocation2] sm:$0xff]
    %v139 = vperm.slane %v111, 0
    %140 = vrot.lane.b32.xlu0 %v139, 64
    %v141 = vpop.permute.xlu0 %140
    %v143 = vadd.f32 %v135, %v141
    %v144 = vadd.f32 %v137, %v135
    %v145 = vxor.u32 %v144, 2147483648
    %v146 = vmul.f32 %v145, 1.442695
    %v147 = vpow.pop %v146
    %v148 = vadd.f32 %v147, 1.0
    %v149 = vrcp.pop %v148
    %v150 = vmul.f32 %v148, %v149
    %v151 = vsub.f32 1.0, %v150
    %v152 = vmul.f32 %v149, %v151
    %v153 = vadd.f32 %v149, %v152
    %vm154 = vweird.f32 %v148
    %vm155 = vweird.f32 %v149
    %vm156 = vmor %vm154, %vm155
    %v157 = vsel %vm156, %v149, %v153
    %v158 = vand.u32 2147483647, %v148
    %vm159 = vcmp.eq.f32.partialorder %v158, 8.507059e+37
    %v160 = vand.u32 %v148, 2147483648
    %v161 = vor.u32 1.1754944e-38, %v160
    %v162 = vsel %vm159, %v161, %v157
    %v163 = vmul.f32 1.0, %v162
    %165 = vrot.lane.b32.xlu0 %v143, 64
    %v166 = vpop.permute.xlu0 %165
    %v168 = vmul.f32 %v163, %v166
    %170 = vrot.lane.b32.xlu0 %v168, 64
    %v171 = vpop.permute.xlu0 %170
    %v173 = vadd.f32 %v137, %v171
    %v174 = vtanh.pop %v173
    %176 = vrot.lane.b32.xlu0 %v174, 64
    %v177 = vpop.permute.xlu0 %176
    %v179 = vsub.f32 %v112, %v177
    %181 = vrot.lane.b32.xlu0 %v179, 32
    %v182 = vpop.permute.xlu0 %181
    %v184 = vmul.f32 %v163, %v182
    %186 = vrot.lane.b32.xlu0 %v184, 32
    %v187 = vpop.permute.xlu0 %186
    %v189 = vadd.f32 %v174, %v187
    %191 = vrot.lane.b32.xlu0 %v189, 64
    %v192 = vpop.permute.xlu0 %191
    %194 = vst.msk [vmem:[#allocation9] sm:$0xff] %vm113, %v192
    // Predicated region
    $region42: #{tpu_custom_call.1} parent=1 // pred_check
      _
    $region43: #{tpu_custom_call.1} parent=1 // pred_check_branch
      %196 = sbr.rel (0) target = $region45
    $region44: #{tpu_custom_call.1} parent=1 // pred_region
      %198 = vsyncadd [#allocation5], 0
      %s200 = sshll.u32 [#allocation9], 4
      %s201 = int_to_ptr.vmem [resolvable:$true] %s200
      %s202 = sshll.u32 %s6, 4
      %s203 = int_to_ptr.hbm [resolvable:$true] %s202
      %205 = dma.vmem_to_hbm [thread:$0]  %s201, 128, %s203, [#allocation5]
    $region45: #{tpu_custom_call.1} parent=1 // pred_fallthru
      _
    // Predicated region
    $region46: #{tpu_custom_call.1} parent=1 // pred_check
      _
    $region47: #{tpu_custom_call.1} parent=1 // pred_check_branch
      %207 = sbr.rel (0) target = $region49
    $region48: #{tpu_custom_call.1} parent=1 // pred_region
      %209 = dma.done [#allocation5], 128
    $region49: #{tpu_custom_call.1} parent=1 // pred_fallthru
      _
    %210 = vsyncpa [#allocation4], 1
    %211 = vsyncpa [#allocation7], 1
    %212 = vsyncpa [#allocation5], 1

</llo_original>
